<compile_context>
chip_gen: v6e
topology: v6e:2x2x1
jax: 0.10.0
libtpu: 0.0.40
codegen_flags: <defaults>
</compile_context>

<pallas_src>
import numpy as np
import jax
import jax.numpy as jnp
from jax import lax
from jax.experimental import pallas as pl
from jax.experimental.pallas import tpu as pltpu

_LANE = 128
_SUBLANE = 8


def _round_up(n, m):
    return ((n + m - 1) // m) * m


def _fourier_kernel(x_ref, ball_ref, phase_ref, out_ref):
    # x_ref: (TB, C); ball_ref: (C, W); phase_ref: (1, W); out_ref: (TB, W)
    c = x_ref.shape[1]
    x = x_ref[...]
    # K = C (= 4) contraction stays on the MXU; precision pinned to full f32 so
    # the phase feeding sin() is exact to f32 on every generation (incl. v7x).
    r = jnp.dot(
        x,
        ball_ref[...],
        preferred_element_type=jnp.float32,
        precision=lax.Precision.HIGHEST,
    )
    r = r + phase_ref[...]                          # broadcast (1, W) over rows
    # Single 128-lane-aligned full-width store: sin and cos regions are both
    # produced by one sin() thanks to the pi/2 phase row.
    out_ref[...] = jnp.sin(r).astype(out_ref.dtype)
    # Patch the C passthrough columns (aligned start, lane-masked narrow store).
    out_ref[:, :c] = x.astype(out_ref.dtype)


def _vmem_capacity_bytes():
    try:
        info = pltpu.get_tpu_info()
        cap = int(getattr(info, "vmem_capacity_bytes", 0))
        if cap > 0:
            return cap
    except Exception:
        pass
    return 64 * 1024 * 1024          # v7x per-TC capacity: safe lower bound


def _pick_tile_b(N, C, W, out_itemsize):
    """Batch tile (multiple of 8) sized from the actual VMEM capacity."""
    Wp = _round_up(W, _LANE)
    Cp = _round_up(C, _LANE)
    # Per-row VMEM footprint:
    #   x block   (f32, double-buffered)        : 2 * Cp * 4
    #   out block (out dtype, double-buffered)  : 2 * Wp * out_itemsize
    #   in-kernel f32 temporaries (r, r+phase, sin(r) pre-cast): ~3 * Wp * 4
    per_row = 2 * Cp * 4 + 2 * Wp * out_itemsize + 3 * Wp * 4
    # Resident weights (B_all + phase); counted double-buffered to stay safe.
    weight_bytes = 2 * (_round_up(C, _SUBLANE) + _SUBLANE) * Wp * 4

    budget = int(0.35 * _vmem_capacity_bytes()) - weight_bytes
    tile_b = max(_SUBLANE, (max(budget, 0) // per_row) // _SUBLANE * _SUBLANE)
    tile_b = min(tile_b, 4096)                 # diminishing returns past this
    # v7x megacore: guarantee >= 2 grid steps whenever N spans more than one
    # sublane group so both TensorCores get work (negligible cost elsewhere).
    tile_b = min(tile_b, max(_SUBLANE, _round_up(-(-N // 2), _SUBLANE)))
    return tile_b, per_row, weight_bytes


def fourier_feature_transform(x, B, *, tile_b=None, out_dtype=None):
    """x: [N, C] f32, B: [C, M] f32 -> [N, C + 2*M] = [x | sin(2pi x@B) | cos(2pi x@B)].

    out_dtype defaults to x.dtype (f32, matching torch).  Pass jnp.bfloat16 to
    halve output HBM traffic (near-2x on v5e/v6e) if downstream accepts bf16.
    """
    N, C = x.shape
    Cb, M = B.shape
    assert C == Cb, f"Expected input to have {Cb} channels (got {C} channels)"
    out_dtype = jnp.dtype(out_dtype if out_dtype is not None else x.dtype)
    W = C + 2 * M

    # ---- Placed weights & phase (tiny, C x W).  In a module these would be
    # ---- built once at init.  2*pi folded here, not per element in-kernel.
    two_pi_B = (2.0 * np.pi) * B.astype(jnp.float32)
    b_all = jnp.concatenate(
        [jnp.zeros((C, C), jnp.float32), two_pi_B, two_pi_B], axis=1)          # (C, W)
    phase = jnp.concatenate(
        [jnp.zeros((1, C + M), jnp.float32),
         jnp.full((1, M), np.pi / 2, jnp.float32)], axis=1)                    # (1, W)

    auto_tile, per_row, weight_bytes = _pick_tile_b(N, C, W, out_dtype.itemsize)
    tile_b = auto_tile if tile_b is None else tile_b
    if tile_b >= N:
        tile_b = N      # single block == full array dims (valid for any N)
    assert tile_b == N or tile_b % _SUBLANE == 0, (
        "tile_b must be a multiple of 8 (or equal to N)")

    # No pad / no crop: cdiv grid + Pallas-clipped ragged last block means the
    # output crosses HBM exactly once and rows >= N are never written.
    grid_b = pl.cdiv(N, tile_b)

    needed = tile_b * per_row + weight_bytes
    cap = _vmem_capacity_bytes()
    vmem_limit = int(max(min(needed + (8 << 20), cap - (4 << 20)), 16 << 20))

    return pl.pallas_call(
        _fourier_kernel,
        out_shape=jax.ShapeDtypeStruct((N, W), out_dtype),
        grid=(grid_b,),
        in_specs=[
            pl.BlockSpec((tile_b, C), lambda i: (i, 0)),   # x batch tile
            pl.BlockSpec((C, W), lambda i: (0, 0)),        # B_all: VMEM-resident
            pl.BlockSpec((1, W), lambda i: (0, 0)),        # phase: VMEM-resident
        ],
        out_specs=pl.BlockSpec((tile_b, W), lambda i: (i, 0)),
        compiler_params=pltpu.CompilerParams(
            dimension_semantics=("parallel",),             # megacore-shardable (v7x)
            vmem_limit_bytes=vmem_limit,
        ),
    )(x.astype(jnp.float32), b_all, phase)


def make_B(key, num_input_channels, mapping_size, scale):
    """Reproduces the module's __init__: B ~ N(0,1)*scale, rows sorted
    ascending by L2 norm (python sorted() is ascending & stable)."""
    B = jax.random.normal(key, (num_input_channels, mapping_size), jnp.float32) * scale
    norms = jnp.linalg.norm(B, axis=1)
    return B[jnp.argsort(norms)]


def reference(x, B):
    res = 2.0 * np.pi * jnp.dot(x, B, precision=lax.Precision.HIGHEST)
    return jnp.concatenate([x, jnp.sin(res), jnp.cos(res)], axis=1)


if __name__ == "__main__":
    key = jax.random.PRNGKey(0)
    k_b, k_x = jax.random.split(key)

    num_input_channels = 4
    mapping_size = 128
    scale = 10
    # batch deliberately NOT a multiple of the batch tile: exercises the ragged
    # last block (no pad+crop path) and the >=2-grid-step megacore clamp.
    batch = 12

    B = make_B(k_b, num_input_channels, mapping_size, scale)
    x = jax.random.uniform(k_x, (batch, num_input_channels), jnp.float32)

    out = fourier_feature_transform(x, B)
    out = jax.block_until_ready(out)
    assert out.shape == (batch, num_input_channels + 2 * mapping_size), out.shape

    ref = jax.block_until_ready(reference(x, B))
    # Tolerance note: with scale=10 the phases reach ~2.5e2 rad, where one f32
    # ulp is ~3e-5.  The kernel folds 2*pi into B and computes cos(t) as
    # sin(t + pi/2); the reference computes 2*pi*(x@B) then sin/cos.  These are
    # two valid f32 evaluations whose phases differ by a handful of ulps, and
    # |d sin| = |d phase| at these magnitudes, so allow ~5e-4 absolute (scales
    # linearly with `scale`).  Any precision blunder (bf16 matmul) or placement
    # bug would show up as O(0.1-1) errors, far outside this.
    np.testing.assert_allclose(np.asarray(out), np.asarray(ref), rtol=1e-5, atol=5e-4)

    print("KERNEL_OK")
</pallas_src>

<mosaic_0001>
module attributes {stable_mosaic.version = 11 : i64} {
  func.func @_fourier_kernel(%arg0: i32, %arg1: memref<8x4xf32, #tpu.memory_space<vmem>>, %arg2: memref<4x260xf32, #tpu.memory_space<vmem>>, %arg3: memref<1x260xf32, #tpu.memory_space<vmem>>, %arg4: memref<8x260xf32, #tpu.memory_space<vmem>>) attributes {dimension_semantics = [#tpu.dimension_semantics<parallel>], iteration_bounds = array<i64: 2>, scalar_prefetch = 0 : i64, scratch_operands = 0 : i64, tpu.core_type = #tpu.core_type<tc>, window_params = [{transform_indices = @transform_0, window_bounds = array<i64: 8, 4>}, {pipeline_mode = #tpu.pipeline_mode<synchronous>, transform_indices = @transform_1, window_bounds = array<i64: 4, 260>}, {pipeline_mode = #tpu.pipeline_mode<synchronous>, transform_indices = @transform_2, window_bounds = array<i64: 1, 260>}, {transform_indices = @transform_3, window_bounds = array<i64: 8, 260>}]} {
    %c0 = arith.constant 0 : index
    %c0_0 = arith.constant 0 : index
    %0 = vector.load %arg1[%c0, %c0_0] : memref<8x4xf32, #tpu.memory_space<vmem>>, vector<8x4xf32>
    %c0_1 = arith.constant 0 : index
    %c0_2 = arith.constant 0 : index
    %1 = vector.load %arg2[%c0_1, %c0_2] : memref<4x260xf32, #tpu.memory_space<vmem>>, vector<4x260xf32>
    %cst = arith.constant dense<0.000000e+00> : vector<8x260xf32>
    %2 = tpu.matmul %0, %1, %cst {dimension_numbers = #tpu.dot_dimension_numbers<[1], [0], [0], [1], [0, 0, 1, 1], [], []>, precision = #tpu.contract_precision<fp32>} : vector<8x4xf32>, vector<4x260xf32>, vector<8x260xf32> -> vector<8x260xf32>
    %c0_3 = arith.constant 0 : index
    %c0_4 = arith.constant 0 : index
    %3 = vector.load %arg3[%c0_3, %c0_4] : memref<1x260xf32, #tpu.memory_space<vmem>>, vector<1x260xf32>
    %4 = vector.broadcast %3 : vector<1x260xf32> to vector<8x260xf32>
    %5 = arith.addf %2, %4 : vector<8x260xf32>
    %6 = math.sin %5 : vector<8x260xf32>
    %c0_5 = arith.constant 0 : index
    %c0_6 = arith.constant 0 : index
    %7 = vector.load %arg4[%c0_5, %c0_6] : memref<8x260xf32, #tpu.memory_space<vmem>>, vector<8x260xf32>
    tpu.vector_store %arg4[%c0_5, %c0_6], %6 {strides = array<i32>} : memref<8x260xf32, #tpu.memory_space<vmem>>, vector<8x260xf32>,
    %c0_7 = arith.constant 0 : index
    %c0_8 = arith.constant 0 : index
    %8 = vector.load %arg4[%c0_7, %c0_8] : memref<8x260xf32, #tpu.memory_space<vmem>>, vector<8x4xf32>
    tpu.vector_store %arg4[%c0_7, %c0_8], %0 {strides = array<i32>} : memref<8x260xf32, #tpu.memory_space<vmem>>, vector<8x4xf32>,
    return
  }
  func.func @transform_0(%arg0: i32) -> (i32, i32) {
    %c0_i32 = arith.constant 0 : i32
    %c0_i32_0 = arith.constant 0 : i32
    return %arg0, %c0_i32 : i32, i32
  }
  func.func @transform_1(%arg0: i32) -> (i32, i32) {
    %c0_i32 = arith.constant 0 : i32
    %c0_i32_0 = arith.constant 0 : i32
    %c0_i32_1 = arith.constant 0 : i32
    return %c0_i32, %c0_i32_0 : i32, i32
  }
  func.func @transform_2(%arg0: i32) -> (i32, i32) {
    %c0_i32 = arith.constant 0 : i32
    %c0_i32_0 = arith.constant 0 : i32
    %c0_i32_1 = arith.constant 0 : i32
    return %c0_i32, %c0_i32_0 : i32, i32
  }
  func.func @transform_3(%arg0: i32) -> (i32, i32) {
    %c0_i32 = arith.constant 0 : i32
    %c0_i32_0 = arith.constant 0 : i32
    return %arg0, %c0_i32 : i32, i32
  }
}

</mosaic_0001>

<llo_original>
// kernel: tpu_custom_call.1
$region0: #{tpu_custom_call.1}
  #allocation0 [shape = 'u32[]', space=smem, size = 0x4, offset = 0x4, fixed_abs, tag = 'smem constant byte address 0x4 - core index']
  #allocation1 [shape = 'u32[144,128]{1,0:T(1,128)}', space=vmem, size = 0x12000, scoped, tag = 'internal scratch']
  %s0 = inlined_call_operand.vmem [shape: f32[12,4], index: 0, kind: input, shape index: {}]
  %s1 = inlined_call_operand.vmem [shape: f32[4,260], index: 1, kind: input, shape index: {}]
  %s2 = inlined_call_operand.vmem [shape: f32[1,260], index: 2, kind: input, shape index: {}]
  %s3 = inlined_call_operand.hbm [shape: f32[12,260], index: 3, kind: output, shape index: {}]
  %s4 = sld [smem:[#allocation0]]
  $region45: #{tpu_custom_call.1} parent=0
    _
  %s6 = ssub.s32 1, %s4
  %s7 = scalar_select 0, %s6, %s4
  $region1: #{tpu_custom_call.1} parent=0
    #allocation2 [shape = 'u8[24576]{0}', space=vmem, size = 0x6000, scoped, tag = 'output window, operand 0']
    #allocation3 [shape = 's32[2]{0}', space=sflag, size = 0x8, scoped, tag = 'scoped memory for tpu_custom_call.1']
    %8 = vsyncpa [#allocation3], 0
    %s9 = scalar_lea.sflag [#allocation3], 1
    %10 = vsyncpa %s9, 0
    loop: start=0, step=1, limit=4
    $region2: #{tpu_custom_call.1} parent=1 // loop_pre_header
      _
    $region3: #{tpu_custom_call.1} parent=1 // loop_header
      %s12 = sphi 0, %s16
      %p13 = scmp.ge.s32.totalorder %s12, 4
      %s22 = sphi 0, %s24
      %s25 = sphi 0, %s22
      %s26 = sphi 0, %s25
      %s42 = sphi 0, %s26
      %s46 = sphi 0, %s46
      %s48 = sphi 0, %s46
      %s49 = sphi 0, %s48
      %s63 = sphi 0, %s49
      %s67 = sphi 0, %s67
      %s69 = sphi 0, %s67
      %s70 = sphi 0, %s69
      %s84 = sphi 0, %s70
      %s90 = sphi 0, %s92
      %s93 = sphi 0, %s90
      %s94 = sphi 0, %s93
      %s110 = sphi 0, %s94
    $region4: #{tpu_custom_call.1} parent=1 // loop_header_branch
      %15 = sbr.rel (%p13) target = $region8
    $region5: #{tpu_custom_call.1} parent=1 // loop_body
      %s17 = ssub.s32 %s12, 1
      %s18 = ssub.s32 %s12, 2
      %s19 = sadd.s32 %s12, 1
      %s20 = ssub.s32 %s12, %s19
      %p21 = scmp.eq.s32.totalorder %s20, 0
      %s23 = sadd.s32 %s22, 1
      %s24 = scalar_select %p21, %s22, %s23
      %p27 = pneg %p21
      %p28 = scmp.eq.s32.totalorder %s12, 1
      %p29 = por %p27, %p28
      %p30 = scmp.ne.s32.totalorder %s22, %s25
      %p31 = scmp.eq.s32.totalorder %s12, 0
      %p32 = por %p30, %p31
      %p33 = scmp.ne.s32.totalorder %s22, %s25
      %p34 = scmp.eq.s32.totalorder %s17, 1
      %p35 = por %p33, %p34
      %p36 = scmp.ne.s32.totalorder %s25, %s26
      %p37 = scmp.eq.s32.totalorder %s17, 0
      %p38 = por %p36, %p37
      %p39 = scmp.ne.s32.totalorder %s25, %s26
      %p40 = scmp.eq.s32.totalorder %s18, 1
      %p41 = por %p39, %p40
      %p43 = scmp.ne.s32.totalorder %s26, %s42
      %p44 = scmp.eq.s32.totalorder %s18, 0
      %p45 = por %p43, %p44
      %s47 = sadd.s32 %s46, 1
      %p50 = scmp.eq.s32.totalorder %s12, 1
      %p51 = scmp.ne.s32.totalorder %s46, %s48
      %p52 = scmp.eq.s32.totalorder %s12, 0
      %p53 = por %p51, %p52
      %p54 = scmp.ne.s32.totalorder %s46, %s48
      %p55 = scmp.eq.s32.totalorder %s17, 1
      %p56 = por %p54, %p55
      %p57 = scmp.ne.s32.totalorder %s48, %s49
      %p58 = scmp.eq.s32.totalorder %s17, 0
      %p59 = por %p57, %p58
      %p60 = scmp.ne.s32.totalorder %s48, %s49
      %p61 = scmp.eq.s32.totalorder %s18, 1
      %p62 = por %p60, %p61
      %p64 = scmp.ne.s32.totalorder %s49, %s63
      %p65 = scmp.eq.s32.totalorder %s18, 0
      %p66 = por %p64, %p65
      %s68 = sadd.s32 %s67, 1
      %p71 = scmp.eq.s32.totalorder %s12, 1
      %p72 = scmp.ne.s32.totalorder %s67, %s69
      %p73 = scmp.eq.s32.totalorder %s12, 0
      %p74 = por %p72, %p73
      %p75 = scmp.ne.s32.totalorder %s67, %s69
      %p76 = scmp.eq.s32.totalorder %s17, 1
      %p77 = por %p75, %p76
      %p78 = scmp.ne.s32.totalorder %s69, %s70
      %p79 = scmp.eq.s32.totalorder %s17, 0
      %p80 = por %p78, %p79
      %p81 = scmp.ne.s32.totalorder %s69, %s70
      %p82 = scmp.eq.s32.totalorder %s18, 1
      %p83 = por %p81, %p82
      %p85 = scmp.ne.s32.totalorder %s70, %s84
      %p86 = scmp.eq.s32.totalorder %s18, 0
      %p87 = por %p85, %p86
      %s88 = ssub.s32 %s12, %s19
      %p89 = scmp.eq.s32.totalorder %s88, 0
      %s91 = sadd.s32 %s90, 1
      %s92 = scalar_select %p89, %s90, %s91
      %p95 = pneg %p89
      %p96 = scmp.eq.s32.totalorder %s12, 1
      %p97 = por %p95, %p96
      %p98 = scmp.ne.s32.totalorder %s90, %s93
      %p99 = scmp.eq.s32.totalorder %s12, 0
      %p100 = por %p98, %p99
      %p101 = scmp.ne.s32.totalorder %s90, %s93
      %p102 = scmp.eq.s32.totalorder %s17, 1
      %p103 = por %p101, %p102
      %p104 = scmp.ne.s32.totalorder %s93, %s94
      %p105 = scmp.eq.s32.totalorder %s17, 0
      %p106 = por %p104, %p105
      %p107 = scmp.ne.s32.totalorder %s93, %s94
      %p108 = scmp.eq.s32.totalorder %s18, 1
      %p109 = por %p107, %p108
      %p111 = scmp.ne.s32.totalorder %s94, %s110
      %p112 = scmp.eq.s32.totalorder %s18, 0
      %p113 = por %p111, %p112
      %p114 = scmp.le.s32.totalorder 1, %s12
      %p115 = scmp.lt.s32.totalorder %s12, 3
      %p116 = pnand %p114, %p115
      %p117 = pneg %p116
      // Predicated region
      $region9: #{tpu_custom_call.1} parent=5 // pred_check
        _
      $region10: #{tpu_custom_call.1} parent=5 // pred_check_branch
        %119 = sbr.rel (%p116) target = $region12
      $region11: #{tpu_custom_call.1} parent=5 // pred_region
        %s120 = ssub.s32 %s12, 1
        // Predicated region
        $region13: #{tpu_custom_call.1} parent=11 // pred_check
          %p121 = pneg %p59
        $region14: #{tpu_custom_call.1} parent=11 // pred_check_branch
          %123 = sbr.rel (%p121) target = $region16
        $region15: #{tpu_custom_call.1} parent=11 // pred_region
          _
        $region16: #{tpu_custom_call.1} parent=11 // pred_fallthru
          _
        // Predicated region
        $region17: #{tpu_custom_call.1} parent=11 // pred_check
          %p124 = pneg %p80
        $region18: #{tpu_custom_call.1} parent=11 // pred_check_branch
          %126 = sbr.rel (%p124) target = $region20
        $region19: #{tpu_custom_call.1} parent=11 // pred_region
          _
        $region20: #{tpu_custom_call.1} parent=11 // pred_fallthru
          _
      $region12: #{tpu_custom_call.1} parent=5 // pred_fallthru
        _
      %p127 = scmp.lt.s32.totalorder %s12, 2
      // Predicated region
      $region21: #{tpu_custom_call.1} parent=5 // pred_check
        %p128 = pneg %p127
      $region22: #{tpu_custom_call.1} parent=5 // pred_check_branch
        %130 = sbr.rel (%p128) target = $region24
      $region23: #{tpu_custom_call.1} parent=5 // pred_region
        // Predicated region
        $region25: #{tpu_custom_call.1} parent=23 // pred_check
          %p131 = pneg %p32
        $region26: #{tpu_custom_call.1} parent=23 // pred_check_branch
          %133 = sbr.rel (%p131) target = $region28
        $region27: #{tpu_custom_call.1} parent=23 // pred_region
          %p134 = scmp.lt.s32.totalorder %s12, 1
          %s135 = scalar_select %p134, %s12, 1
          %s136 = smul.addr %s135, 8
          %s137 = scalar_lea.vmem %s0, %s136
        $region28: #{tpu_custom_call.1} parent=23 // pred_fallthru
          _
      $region24: #{tpu_custom_call.1} parent=5 // pred_fallthru
        _
      %p138 = scmp.le.s32.totalorder 1, %s12
      %p139 = scmp.lt.s32.totalorder %s12, 3
      %p140 = pnand %p138, %p139
      %p141 = pneg %p140
      // Predicated region
      $region29: #{tpu_custom_call.1} parent=5 // pred_check
        _
      $region30: #{tpu_custom_call.1} parent=5 // pred_check_branch
        %143 = sbr.rel (%p140) target = $region32
      $region31: #{tpu_custom_call.1} parent=5 // pred_region
        %s144 = ssub.s32 %s12, 1
        %p145 = scmp.lt.s32.totalorder %s17, 1
        %s146 = scalar_select %p145, %s17, 1
        %s147 = smul.addr %s146, 8
        %s148 = scalar_lea.vmem %s0, %s147
        %p149 = pneg %p38
        %p150 = pneg %p35
        %p151 = pneg %p59
        %p152 = pneg %p56
        %p153 = pneg %p80
        %p154 = pneg %p77
        %p155 = pneg %p106
        %p156 = pneg %p103
        %s157 = sand.u32 %s93, 1
        %s158 = scalar_lea.sflag [#allocation3], %s157
        %s159 = sand.u32 %s93, 1
        %s160 = smul.addr %s159, 24
        %s161 = scalar_lea.vmem [#allocation2], %s160
        %p162 = scmp.lt.s32.totalorder %s17, 1
        %s163 = scalar_select %p162, %s17, 1
        %s164 = smul.addr %s163, 8
        %s165 = scalar_lea.vmem %s0, %s164
        %v166 = vld [vmem:[%s165] sm:$0xff]
        %v167 = vld [vmem:[%s1] sm:$0xff]
        %v168 = vld [vmem:[%s1 + $0x8] sm:$0xf]
        %v169 = vld [vmem:[%s2] sm:$0x7]
        %v171 = vlaneseq
        %v172 = vshrl.u32 %v171, 7
        %v173 = vsub.s32 0, %v172
        %v174 = vrot.slane %v169, %v173
        %v175 = vlaneseq
        %v176 = vshrl.u32 %v175, 7
        %v177 = vsub.s32 1, %v176
        %v178 = vrot.slane %v169, %v177
        %v179 = vlaneseq
        %v180 = vshrl.u32 %v179, 7
        %v181 = vsub.s32 2, %v180
        %v182 = vrot.slane %v169, %v181
        %v188 = vcombine.high %v167, %v167
        %vm189 = vcmask 31744
        %v191 = vsel %vm189, %v166, 0
        %vm193 = vcmask 1043456
        %v194 = vsel %vm193, %v167, 0
        %v196 = vsel %vm193, %v188, 0
        %v198 = vsel %vm193, %v168, 0
        %200 = vmatprep.subr.mxu0 0.0
        %201 = vmatpush1.msra.mxu0 0.0
        %202 = vmatprep.subr.mxu0 0.0
        %203 = vmatpush1.msra.mxu0 0.0
        %204 = vmatprep.subr.mxu0 0.0
        %205 = vmatpush1.msra.mxu0 0.0
        %206 = vmatprep.subr.mxu0 0.0
        %207 = vmatpush1.msra.mxu0 0.0
        %208 = vmatprep.subr.mxu0 0.0
        %209 = vmatpush1.msra.mxu0 0.0
        %210 = vmatprep.subr.mxu0 0.0
        %211 = vmatpush1.msra.mxu0 0.0
        %212 = vmatprep.subr.mxu0 0.0
        %213 = vmatpush1.msra.mxu0 0.0
        %214 = vmatprep.subr.mxu0 0.0
        %215 = vmatpush1.msra.mxu0 0.0
        %216 = vmatprep.subr.mxu0 0.0
        %217 = vmatpush1.msra.mxu0 0.0
        %218 = vmatprep.subr.mxu0 0.0
        %219 = vmatpush1.msra.mxu0 0.0
        %220 = vmatprep.subr.mxu0 0.0
        %221 = vmatpush1.msra.mxu0 0.0
        %222 = vmatprep.subr.mxu0 0.0
        %223 = vmatpush1.msra.mxu0 0.0
        %224 = vmatprep.subr.mxu0 0.0
        %225 = vmatpush1.msra.mxu0 0.0
        %226 = vmatprep.subr.mxu0 0.0
        %227 = vmatpush1.msra.mxu0 0.0
        %228 = vmatprep.subr.mxu0 0.0
        %229 = vmatpush1.msra.mxu0 0.0
        %v230 = vand.u32 %v196, 4294901760
        %231 = vmatprep.subr.mxu0 %v230
        %v232 = vand.u32 %v194, 4294901760
        %233 = vmatpush1.msra.mxu0 %v232
        %234 = vmatprep.subr.mxu0 0.0
        %235 = vmatpush2.msra.mxu0 0.0
        %236 = vmatprep.subr.mxu0 0.0
        %237 = vmatpush2.msra.mxu0 0.0
        %238 = vmatprep.subr.mxu0 0.0
        %239 = vmatpush2.msra.mxu0 0.0
        %240 = vmatprep.subr.mxu0 0.0
        %241 = vmatpush2.msra.mxu0 0.0
        %242 = vmatprep.subr.mxu0 0.0
        %243 = vmatpush2.msra.mxu0 0.0
        %244 = vmatprep.subr.mxu0 0.0
        %245 = vmatpush2.msra.mxu0 0.0
        %246 = vmatprep.subr.mxu0 0.0
        %247 = vmatpush2.msra.mxu0 0.0
        %248 = vmatprep.subr.mxu0 0.0
        %249 = vmatpush2.msra.mxu0 0.0
        %250 = vmatprep.subr.mxu0 0.0
        %251 = vmatpush2.msra.mxu0 0.0
        %252 = vmatprep.subr.mxu0 0.0
        %253 = vmatpush2.msra.mxu0 0.0
        %254 = vmatprep.subr.mxu0 0.0
        %255 = vmatpush2.msra.mxu0 0.0
        %256 = vmatprep.subr.mxu0 0.0
        %257 = vmatpush2.msra.mxu0 0.0
        %258 = vmatprep.subr.mxu0 0.0
        %259 = vmatpush2.msra.mxu0 0.0
        %260 = vmatprep.subr.mxu0 0.0
        %261 = vmatpush2.msra.mxu0 0.0
        %262 = vmatprep.subr.mxu0 0.0
        %263 = vmatpush2.msra.mxu0 0.0
        %264 = vmatprep.subr.mxu0 0.0
        %265 = vmatpush2.msra.mxu0 0.0
        %266 = vmatprep.mubr.f32.mxu0 0.0
        %v267 = vand.u32 %v191, 4294901760
        %v268 = vsub.f32 %v191, %v267
        %v269 = vand.u32 %v268, 4294901760
        %v270 = vsub.f32 %v268, %v269
        %v271 = vand.u32 %v270, 4294901760
        %272 = vmatmul.mubr.f32.gmra.mxu0 %v271
        %v273 = vpop.f32.mrf.mxu0
        %v274 = vadd.f32 %v174, %v273
        %v275 = vpop.f32.mrf.mxu0
        %v276 = vadd.f32 %v178, %v275
        %277 = vdwg.mxu0
        %278 = vmatprep.subr.mxu0 0.0
        %279 = vmatpush1.msra.mxu0 0.0
        %280 = vmatprep.subr.mxu0 0.0
        %281 = vmatpush1.msra.mxu0 0.0
        %282 = vmatprep.subr.mxu0 0.0
        %283 = vmatpush1.msra.mxu0 0.0
        %284 = vmatprep.subr.mxu0 0.0
        %285 = vmatpush1.msra.mxu0 0.0
        %286 = vmatprep.subr.mxu0 0.0
        %287 = vmatpush1.msra.mxu0 0.0
        %288 = vmatprep.subr.mxu0 0.0
        %289 = vmatpush1.msra.mxu0 0.0
        %290 = vmatprep.subr.mxu0 0.0
        %291 = vmatpush1.msra.mxu0 0.0
        %292 = vmatprep.subr.mxu0 0.0
        %293 = vmatpush1.msra.mxu0 0.0
        %294 = vmatprep.subr.mxu0 0.0
        %295 = vmatpush1.msra.mxu0 0.0
        %296 = vmatprep.subr.mxu0 0.0
        %297 = vmatpush1.msra.mxu0 0.0
        %298 = vmatprep.subr.mxu0 0.0
        %299 = vmatpush1.msra.mxu0 0.0
        %300 = vmatprep.subr.mxu0 0.0
        %301 = vmatpush1.msra.mxu0 0.0
        %302 = vmatprep.subr.mxu0 0.0
        %303 = vmatpush1.msra.mxu0 0.0
        %304 = vmatprep.subr.mxu0 0.0
        %305 = vmatpush1.msra.mxu0 0.0
        %306 = vmatprep.subr.mxu0 0.0
        %307 = vmatpush1.msra.mxu0 0.0
        %v308 = vand.u32 %v196, 4294901760
        %v309 = vsub.f32 %v196, %v308
        %v310 = vand.u32 %v309, 4294901760
        %v311 = vsub.f32 %v309, %v310
        %v312 = vand.u32 %v311, 4294901760
        %313 = vmatprep.subr.mxu0 %v312
        %v314 = vand.u32 %v194, 4294901760
        %v315 = vsub.f32 %v194, %v314
        %v316 = vand.u32 %v315, 4294901760
        %v317 = vsub.f32 %v315, %v316
        %v318 = vand.u32 %v317, 4294901760
        %319 = vmatpush1.msra.mxu0 %v318
        %320 = vmatprep.subr.mxu0 0.0
        %321 = vmatpush2.msra.mxu0 0.0
        %322 = vmatprep.subr.mxu0 0.0
        %323 = vmatpush2.msra.mxu0 0.0
        %324 = vmatprep.subr.mxu0 0.0
        %325 = vmatpush2.msra.mxu0 0.0
        %326 = vmatprep.subr.mxu0 0.0
        %327 = vmatpush2.msra.mxu0 0.0
        %328 = vmatprep.subr.mxu0 0.0
        %329 = vmatpush2.msra.mxu0 0.0
        %330 = vmatprep.subr.mxu0 0.0
        %331 = vmatpush2.msra.mxu0 0.0
        %332 = vmatprep.subr.mxu0 0.0
        %333 = vmatpush2.msra.mxu0 0.0
        %334 = vmatprep.subr.mxu0 0.0
        %335 = vmatpush2.msra.mxu0 0.0
        %336 = vmatprep.subr.mxu0 0.0
        %337 = vmatpush2.msra.mxu0 0.0
        %338 = vmatprep.subr.mxu0 0.0
        %339 = vmatpush2.msra.mxu0 0.0
        %340 = vmatprep.subr.mxu0 0.0
        %341 = vmatpush2.msra.mxu0 0.0
        %342 = vmatprep.subr.mxu0 0.0
        %343 = vmatpush2.msra.mxu0 0.0
        %344 = vmatprep.subr.mxu0 0.0
        %345 = vmatpush2.msra.mxu0 0.0
        %346 = vmatprep.subr.mxu0 0.0
        %347 = vmatpush2.msra.mxu0 0.0
        %348 = vmatprep.subr.mxu0 0.0
        %349 = vmatpush2.msra.mxu0 0.0
        %350 = vmatprep.subr.mxu0 0.0
        %351 = vmatpush2.msra.mxu0 0.0
        %352 = vmatprep.mubr.f32.mxu0 0.0
        %v353 = vand.u32 %v191, 4294901760
        %354 = vmatmul.mubr.f32.gmra.mxu0 %v353
        %v355 = vpop.f32.mrf.mxu0
        %v356 = vadd.f32 %v274, %v355
        %v357 = vpop.f32.mrf.mxu0
        %v358 = vadd.f32 %v276, %v357
        %359 = vdwg.mxu0
        %360 = vmatprep.subr.mxu0 0.0
        %361 = vmatpush1.msra.mxu0 0.0
        %362 = vmatprep.subr.mxu0 0.0
        %363 = vmatpush1.msra.mxu0 0.0
        %364 = vmatprep.subr.mxu0 0.0
        %365 = vmatpush1.msra.mxu0 0.0
        %366 = vmatprep.subr.mxu0 0.0
        %367 = vmatpush1.msra.mxu0 0.0
        %368 = vmatprep.subr.mxu0 0.0
        %369 = vmatpush1.msra.mxu0 0.0
        %370 = vmatprep.subr.mxu0 0.0
        %371 = vmatpush1.msra.mxu0 0.0
        %372 = vmatprep.subr.mxu0 0.0
        %373 = vmatpush1.msra.mxu0 0.0
        %374 = vmatprep.subr.mxu0 0.0
        %375 = vmatpush1.msra.mxu0 0.0
        %376 = vmatprep.subr.mxu0 0.0
        %377 = vmatpush1.msra.mxu0 0.0
        %378 = vmatprep.subr.mxu0 0.0
        %379 = vmatpush1.msra.mxu0 0.0
        %380 = vmatprep.subr.mxu0 0.0
        %381 = vmatpush1.msra.mxu0 0.0
        %382 = vmatprep.subr.mxu0 0.0
        %383 = vmatpush1.msra.mxu0 0.0
        %384 = vmatprep.subr.mxu0 0.0
        %385 = vmatpush1.msra.mxu0 0.0
        %386 = vmatprep.subr.mxu0 0.0
        %387 = vmatpush1.msra.mxu0 0.0
        %388 = vmatprep.subr.mxu0 0.0
        %389 = vmatpush1.msra.mxu0 0.0
        %v390 = vand.u32 %v196, 4294901760
        %v391 = vsub.f32 %v196, %v390
        %392 = vmatprep.subr.mxu0 %v391
        %v393 = vand.u32 %v194, 4294901760
        %v394 = vsub.f32 %v194, %v393
        %395 = vmatpush1.msra.mxu0 %v394
        %396 = vmatprep.subr.mxu0 0.0
        %397 = vmatpush2.msra.mxu0 0.0
        %398 = vmatprep.subr.mxu0 0.0
        %399 = vmatpush2.msra.mxu0 0.0
        %400 = vmatprep.subr.mxu0 0.0
        %401 = vmatpush2.msra.mxu0 0.0
        %402 = vmatprep.subr.mxu0 0.0
        %403 = vmatpush2.msra.mxu0 0.0
        %404 = vmatprep.subr.mxu0 0.0
        %405 = vmatpush2.msra.mxu0 0.0
        %406 = vmatprep.subr.mxu0 0.0
        %407 = vmatpush2.msra.mxu0 0.0
        %408 = vmatprep.subr.mxu0 0.0
        %409 = vmatpush2.msra.mxu0 0.0
        %410 = vmatprep.subr.mxu0 0.0
        %411 = vmatpush2.msra.mxu0 0.0
        %412 = vmatprep.subr.mxu0 0.0
        %413 = vmatpush2.msra.mxu0 0.0
        %414 = vmatprep.subr.mxu0 0.0
        %415 = vmatpush2.msra.mxu0 0.0
        %416 = vmatprep.subr.mxu0 0.0
        %417 = vmatpush2.msra.mxu0 0.0
        %418 = vmatprep.subr.mxu0 0.0
        %419 = vmatpush2.msra.mxu0 0.0
        %420 = vmatprep.subr.mxu0 0.0
        %421 = vmatpush2.msra.mxu0 0.0
        %422 = vmatprep.subr.mxu0 0.0
        %423 = vmatpush2.msra.mxu0 0.0
        %424 = vmatprep.subr.mxu0 0.0
        %425 = vmatpush2.msra.mxu0 0.0
        %426 = vmatprep.subr.mxu0 0.0
        %427 = vmatpush2.msra.mxu0 0.0
        %428 = vmatprep.mubr.f32.mxu0 0.0
        %v429 = vand.u32 %v191, 4294901760
        %v430 = vsub.f32 %v191, %v429
        %431 = vmatmul.mubr.f32.gmra.mxu0 %v430
        %v432 = vpop.f32.mrf.mxu0
        %v433 = vadd.f32 %v356, %v432
        %v434 = vpop.f32.mrf.mxu0
        %v435 = vadd.f32 %v358, %v434
        %436 = vdwg.mxu0
        %437 = vmatprep.subr.mxu0 0.0
        %438 = vmatpush1.msra.mxu0 0.0
        %439 = vmatprep.subr.mxu0 0.0
        %440 = vmatpush1.msra.mxu0 0.0
        %441 = vmatprep.subr.mxu0 0.0
        %442 = vmatpush1.msra.mxu0 0.0
        %443 = vmatprep.subr.mxu0 0.0
        %444 = vmatpush1.msra.mxu0 0.0
        %445 = vmatprep.subr.mxu0 0.0
        %446 = vmatpush1.msra.mxu0 0.0
        %447 = vmatprep.subr.mxu0 0.0
        %448 = vmatpush1.msra.mxu0 0.0
        %449 = vmatprep.subr.mxu0 0.0
        %450 = vmatpush1.msra.mxu0 0.0
        %451 = vmatprep.subr.mxu0 0.0
        %452 = vmatpush1.msra.mxu0 0.0
        %453 = vmatprep.subr.mxu0 0.0
        %454 = vmatpush1.msra.mxu0 0.0
        %455 = vmatprep.subr.mxu0 0.0
        %456 = vmatpush1.msra.mxu0 0.0
        %457 = vmatprep.subr.mxu0 0.0
        %458 = vmatpush1.msra.mxu0 0.0
        %459 = vmatprep.subr.mxu0 0.0
        %460 = vmatpush1.msra.mxu0 0.0
        %461 = vmatprep.subr.mxu0 0.0
        %462 = vmatpush1.msra.mxu0 0.0
        %463 = vmatprep.subr.mxu0 0.0
        %464 = vmatpush1.msra.mxu0 0.0
        %465 = vmatprep.subr.mxu0 0.0
        %466 = vmatpush1.msra.mxu0 0.0
        %v467 = vand.u32 %v196, 4294901760
        %468 = vmatprep.subr.mxu0 %v467
        %v469 = vand.u32 %v194, 4294901760
        %470 = vmatpush1.msra.mxu0 %v469
        %471 = vmatprep.subr.mxu0 0.0
        %472 = vmatpush2.msra.mxu0 0.0
        %473 = vmatprep.subr.mxu0 0.0
        %474 = vmatpush2.msra.mxu0 0.0
        %475 = vmatprep.subr.mxu0 0.0
        %476 = vmatpush2.msra.mxu0 0.0
        %477 = vmatprep.subr.mxu0 0.0
        %478 = vmatpush2.msra.mxu0 0.0
        %479 = vmatprep.subr.mxu0 0.0
        %480 = vmatpush2.msra.mxu0 0.0
        %481 = vmatprep.subr.mxu0 0.0
        %482 = vmatpush2.msra.mxu0 0.0
        %483 = vmatprep.subr.mxu0 0.0
        %484 = vmatpush2.msra.mxu0 0.0
        %485 = vmatprep.subr.mxu0 0.0
        %486 = vmatpush2.msra.mxu0 0.0
        %487 = vmatprep.subr.mxu0 0.0
        %488 = vmatpush2.msra.mxu0 0.0
        %489 = vmatprep.subr.mxu0 0.0
        %490 = vmatpush2.msra.mxu0 0.0
        %491 = vmatprep.subr.mxu0 0.0
        %492 = vmatpush2.msra.mxu0 0.0
        %493 = vmatprep.subr.mxu0 0.0
        %494 = vmatpush2.msra.mxu0 0.0
        %495 = vmatprep.subr.mxu0 0.0
        %496 = vmatpush2.msra.mxu0 0.0
        %497 = vmatprep.subr.mxu0 0.0
        %498 = vmatpush2.msra.mxu0 0.0
        %499 = vmatprep.subr.mxu0 0.0
        %500 = vmatpush2.msra.mxu0 0.0
        %501 = vmatprep.subr.mxu0 0.0
        %502 = vmatpush2.msra.mxu0 0.0
        %503 = vmatprep.mubr.f32.mxu0 0.0
        %v504 = vand.u32 %v191, 4294901760
        %v505 = vsub.f32 %v191, %v504
        %v506 = vand.u32 %v505, 4294901760
        %507 = vmatmul.mubr.f32.gmra.mxu0 %v506
        %v508 = vpop.f32.mrf.mxu0
        %v509 = vadd.f32 %v433, %v508
        %v510 = vpop.f32.mrf.mxu0
        %v511 = vadd.f32 %v435, %v510
        %512 = vdwg.mxu0
        %513 = vmatprep.subr.mxu0 0.0
        %514 = vmatpush1.msra.mxu0 0.0
        %515 = vmatprep.subr.mxu0 0.0
        %516 = vmatpush1.msra.mxu0 0.0
        %517 = vmatprep.subr.mxu0 0.0
        %518 = vmatpush1.msra.mxu0 0.0
        %519 = vmatprep.subr.mxu0 0.0
        %520 = vmatpush1.msra.mxu0 0.0
        %521 = vmatprep.subr.mxu0 0.0
        %522 = vmatpush1.msra.mxu0 0.0
        %523 = vmatprep.subr.mxu0 0.0
        %524 = vmatpush1.msra.mxu0 0.0
        %525 = vmatprep.subr.mxu0 0.0
        %526 = vmatpush1.msra.mxu0 0.0
        %527 = vmatprep.subr.mxu0 0.0
        %528 = vmatpush1.msra.mxu0 0.0
        %529 = vmatprep.subr.mxu0 0.0
        %530 = vmatpush1.msra.mxu0 0.0
        %531 = vmatprep.subr.mxu0 0.0
        %532 = vmatpush1.msra.mxu0 0.0
        %533 = vmatprep.subr.mxu0 0.0
        %534 = vmatpush1.msra.mxu0 0.0
        %535 = vmatprep.subr.mxu0 0.0
        %536 = vmatpush1.msra.mxu0 0.0
        %537 = vmatprep.subr.mxu0 0.0
        %538 = vmatpush1.msra.mxu0 0.0
        %539 = vmatprep.subr.mxu0 0.0
        %540 = vmatpush1.msra.mxu0 0.0
        %541 = vmatprep.subr.mxu0 0.0
        %542 = vmatpush1.msra.mxu0 0.0
        %v543 = vand.u32 %v196, 4294901760
        %v544 = vsub.f32 %v196, %v543
        %v545 = vand.u32 %v544, 4294901760
        %546 = vmatprep.subr.mxu0 %v545
        %v547 = vand.u32 %v194, 4294901760
        %v548 = vsub.f32 %v194, %v547
        %v549 = vand.u32 %v548, 4294901760
        %550 = vmatpush1.msra.mxu0 %v549
        %551 = vmatprep.subr.mxu0 0.0
        %552 = vmatpush2.msra.mxu0 0.0
        %553 = vmatprep.subr.mxu0 0.0
        %554 = vmatpush2.msra.mxu0 0.0
        %555 = vmatprep.subr.mxu0 0.0
        %556 = vmatpush2.msra.mxu0 0.0
        %557 = vmatprep.subr.mxu0 0.0
        %558 = vmatpush2.msra.mxu0 0.0
        %559 = vmatprep.subr.mxu0 0.0
        %560 = vmatpush2.msra.mxu0 0.0
        %561 = vmatprep.subr.mxu0 0.0
        %562 = vmatpush2.msra.mxu0 0.0
        %563 = vmatprep.subr.mxu0 0.0
        %564 = vmatpush2.msra.mxu0 0.0
        %565 = vmatprep.subr.mxu0 0.0
        %566 = vmatpush2.msra.mxu0 0.0
        %567 = vmatprep.subr.mxu0 0.0
        %568 = vmatpush2.msra.mxu0 0.0
        %569 = vmatprep.subr.mxu0 0.0
        %570 = vmatpush2.msra.mxu0 0.0
        %571 = vmatprep.subr.mxu0 0.0
        %572 = vmatpush2.msra.mxu0 0.0
        %573 = vmatprep.subr.mxu0 0.0
        %574 = vmatpush2.msra.mxu0 0.0
        %575 = vmatprep.subr.mxu0 0.0
        %576 = vmatpush2.msra.mxu0 0.0
        %577 = vmatprep.subr.mxu0 0.0
        %578 = vmatpush2.msra.mxu0 0.0
        %579 = vmatprep.subr.mxu0 0.0
        %580 = vmatpush2.msra.mxu0 0.0
        %581 = vmatprep.subr.mxu0 0.0
        %582 = vmatpush2.msra.mxu0 0.0
        %583 = vmatprep.mubr.f32.mxu0 0.0
        %v584 = vand.u32 %v191, 4294901760
        %585 = vmatmul.mubr.f32.gmra.mxu0 %v584
        %v586 = vpop.f32.mrf.mxu0
        %v587 = vadd.f32 %v509, %v586
        %v588 = vpop.f32.mrf.mxu0
        %v589 = vadd.f32 %v511, %v588
        %590 = vdwg.mxu0
        %591 = vmatprep.subr.mxu0 0.0
        %592 = vmatpush1.msra.mxu0 0.0
        %593 = vmatprep.subr.mxu0 0.0
        %594 = vmatpush1.msra.mxu0 0.0
        %595 = vmatprep.subr.mxu0 0.0
        %596 = vmatpush1.msra.mxu0 0.0
        %597 = vmatprep.subr.mxu0 0.0
        %598 = vmatpush1.msra.mxu0 0.0
        %599 = vmatprep.subr.mxu0 0.0
        %600 = vmatpush1.msra.mxu0 0.0
        %601 = vmatprep.subr.mxu0 0.0
        %602 = vmatpush1.msra.mxu0 0.0
        %603 = vmatprep.subr.mxu0 0.0
        %604 = vmatpush1.msra.mxu0 0.0
        %605 = vmatprep.subr.mxu0 0.0
        %606 = vmatpush1.msra.mxu0 0.0
        %607 = vmatprep.subr.mxu0 0.0
        %608 = vmatpush1.msra.mxu0 0.0
        %609 = vmatprep.subr.mxu0 0.0
        %610 = vmatpush1.msra.mxu0 0.0
        %611 = vmatprep.subr.mxu0 0.0
        %612 = vmatpush1.msra.mxu0 0.0
        %613 = vmatprep.subr.mxu0 0.0
        %614 = vmatpush1.msra.mxu0 0.0
        %615 = vmatprep.subr.mxu0 0.0
        %616 = vmatpush1.msra.mxu0 0.0
        %617 = vmatprep.subr.mxu0 0.0
        %618 = vmatpush1.msra.mxu0 0.0
        %619 = vmatprep.subr.mxu0 0.0
        %620 = vmatpush1.msra.mxu0 0.0
        %v621 = vand.u32 %v196, 4294901760
        %622 = vmatprep.subr.mxu0 %v621
        %v623 = vand.u32 %v194, 4294901760
        %624 = vmatpush1.msra.mxu0 %v623
        %625 = vmatprep.subr.mxu0 0.0
        %626 = vmatpush2.msra.mxu0 0.0
        %627 = vmatprep.subr.mxu0 0.0
        %628 = vmatpush2.msra.mxu0 0.0
        %629 = vmatprep.subr.mxu0 0.0
        %630 = vmatpush2.msra.mxu0 0.0
        %631 = vmatprep.subr.mxu0 0.0
        %632 = vmatpush2.msra.mxu0 0.0
        %633 = vmatprep.subr.mxu0 0.0
        %634 = vmatpush2.msra.mxu0 0.0
        %635 = vmatprep.subr.mxu0 0.0
        %636 = vmatpush2.msra.mxu0 0.0
        %637 = vmatprep.subr.mxu0 0.0
        %638 = vmatpush2.msra.mxu0 0.0
        %639 = vmatprep.subr.mxu0 0.0
        %640 = vmatpush2.msra.mxu0 0.0
        %641 = vmatprep.subr.mxu0 0.0
        %642 = vmatpush2.msra.mxu0 0.0
        %643 = vmatprep.subr.mxu0 0.0
        %644 = vmatpush2.msra.mxu0 0.0
        %645 = vmatprep.subr.mxu0 0.0
        %646 = vmatpush2.msra.mxu0 0.0
        %647 = vmatprep.subr.mxu0 0.0
        %648 = vmatpush2.msra.mxu0 0.0
        %649 = vmatprep.subr.mxu0 0.0
        %650 = vmatpush2.msra.mxu0 0.0
        %651 = vmatprep.subr.mxu0 0.0
        %652 = vmatpush2.msra.mxu0 0.0
        %653 = vmatprep.subr.mxu0 0.0
        %654 = vmatpush2.msra.mxu0 0.0
        %655 = vmatprep.subr.mxu0 0.0
        %656 = vmatpush2.msra.mxu0 0.0
        %657 = vmatprep.mubr.f32.mxu0 0.0
        %v658 = vand.u32 %v191, 4294901760
        %659 = vmatmul.mubr.f32.gmra.mxu0 %v658
        %v660 = vpop.f32.mrf.mxu0
        %v661 = vadd.f32 %v587, %v660
        %v662 = vpop.f32.mrf.mxu0
        %v663 = vadd.f32 %v589, %v662
        %664 = vdwg.mxu0
        %665 = vmatprep.subr.mxu0 0.0
        %666 = vmatpush1.msra.mxu0 0.0
        %667 = vmatprep.subr.mxu0 0.0
        %668 = vmatpush1.msra.mxu0 0.0
        %669 = vmatprep.subr.mxu0 0.0
        %670 = vmatpush1.msra.mxu0 0.0
        %671 = vmatprep.subr.mxu0 0.0
        %672 = vmatpush1.msra.mxu0 0.0
        %673 = vmatprep.subr.mxu0 0.0
        %674 = vmatpush1.msra.mxu0 0.0
        %675 = vmatprep.subr.mxu0 0.0
        %676 = vmatpush1.msra.mxu0 0.0
        %677 = vmatprep.subr.mxu0 0.0
        %678 = vmatpush1.msra.mxu0 0.0
        %679 = vmatprep.subr.mxu0 0.0
        %680 = vmatpush1.msra.mxu0 0.0
        %681 = vmatprep.subr.mxu0 0.0
        %682 = vmatpush1.msra.mxu0 0.0
        %683 = vmatprep.subr.mxu0 0.0
        %684 = vmatpush1.msra.mxu0 0.0
        %685 = vmatprep.subr.mxu0 0.0
        %686 = vmatpush1.msra.mxu0 0.0
        %687 = vmatprep.subr.mxu0 0.0
        %688 = vmatpush1.msra.mxu0 0.0
        %689 = vmatprep.subr.mxu0 0.0
        %690 = vmatpush1.msra.mxu0 0.0
        %691 = vmatprep.subr.mxu0 0.0
        %692 = vmatpush1.msra.mxu0 0.0
        %693 = vmatprep.subr.mxu0 0.0
        %694 = vmatpush1.msra.mxu0 0.0
        %695 = vmatprep.subr.mxu0 0.0
        %v696 = vand.u32 %v198, 4294901760
        %697 = vmatpush1.msra.mxu0 %v696
        %698 = vmatprep.subr.mxu0 0.0
        %699 = vmatpush2.msra.mxu0 0.0
        %700 = vmatprep.subr.mxu0 0.0
        %701 = vmatpush2.msra.mxu0 0.0
        %702 = vmatprep.subr.mxu0 0.0
        %703 = vmatpush2.msra.mxu0 0.0
        %704 = vmatprep.subr.mxu0 0.0
        %705 = vmatpush2.msra.mxu0 0.0
        %706 = vmatprep.subr.mxu0 0.0
        %707 = vmatpush2.msra.mxu0 0.0
        %708 = vmatprep.subr.mxu0 0.0
        %709 = vmatpush2.msra.mxu0 0.0
        %710 = vmatprep.subr.mxu0 0.0
        %711 = vmatpush2.msra.mxu0 0.0
        %712 = vmatprep.subr.mxu0 0.0
        %713 = vmatpush2.msra.mxu0 0.0
        %714 = vmatprep.subr.mxu0 0.0
        %715 = vmatpush2.msra.mxu0 0.0
        %716 = vmatprep.subr.mxu0 0.0
        %717 = vmatpush2.msra.mxu0 0.0
        %718 = vmatprep.subr.mxu0 0.0
        %719 = vmatpush2.msra.mxu0 0.0
        %720 = vmatprep.subr.mxu0 0.0
        %721 = vmatpush2.msra.mxu0 0.0
        %722 = vmatprep.subr.mxu0 0.0
        %723 = vmatpush2.msra.mxu0 0.0
        %724 = vmatprep.subr.mxu0 0.0
        %725 = vmatpush2.msra.mxu0 0.0
        %726 = vmatprep.subr.mxu0 0.0
        %727 = vmatpush2.msra.mxu0 0.0
        %728 = vmatprep.subr.mxu0 0.0
        %729 = vmatpush2.msra.mxu0 0.0
        %730 = vmatprep.mubr.f32.mxu0 0.0
        %v731 = vand.u32 %v191, 4294901760
        %v732 = vsub.f32 %v191, %v731
        %v733 = vand.u32 %v732, 4294901760
        %v734 = vsub.f32 %v732, %v733
        %v735 = vand.u32 %v734, 4294901760
        %736 = vmatmul.mubr.f32.gmra.mxu0 %v735
        %v737 = vpop.f32.mrf.mxu0
        %v738 = vadd.f32 %v182, %v737
        %v739 = vpop.f32.mrf.mxu0
        %740 = vdwg.mxu0
        %741 = vmatprep.subr.mxu0 0.0
        %742 = vmatpush1.msra.mxu0 0.0
        %743 = vmatprep.subr.mxu0 0.0
        %744 = vmatpush1.msra.mxu0 0.0
        %745 = vmatprep.subr.mxu0 0.0
        %746 = vmatpush1.msra.mxu0 0.0
        %747 = vmatprep.subr.mxu0 0.0
        %748 = vmatpush1.msra.mxu0 0.0
        %749 = vmatprep.subr.mxu0 0.0
        %750 = vmatpush1.msra.mxu0 0.0
        %751 = vmatprep.subr.mxu0 0.0
        %752 = vmatpush1.msra.mxu0 0.0
        %753 = vmatprep.subr.mxu0 0.0
        %754 = vmatpush1.msra.mxu0 0.0
        %755 = vmatprep.subr.mxu0 0.0
        %756 = vmatpush1.msra.mxu0 0.0
        %757 = vmatprep.subr.mxu0 0.0
        %758 = vmatpush1.msra.mxu0 0.0
        %759 = vmatprep.subr.mxu0 0.0
        %760 = vmatpush1.msra.mxu0 0.0
        %761 = vmatprep.subr.mxu0 0.0
        %762 = vmatpush1.msra.mxu0 0.0
        %763 = vmatprep.subr.mxu0 0.0
        %764 = vmatpush1.msra.mxu0 0.0
        %765 = vmatprep.subr.mxu0 0.0
        %766 = vmatpush1.msra.mxu0 0.0
        %767 = vmatprep.subr.mxu0 0.0
        %768 = vmatpush1.msra.mxu0 0.0
        %769 = vmatprep.subr.mxu0 0.0
        %770 = vmatpush1.msra.mxu0 0.0
        %771 = vmatprep.subr.mxu0 0.0
        %v772 = vand.u32 %v198, 4294901760
        %v773 = vsub.f32 %v198, %v772
        %v774 = vand.u32 %v773, 4294901760
        %v775 = vsub.f32 %v773, %v774
        %v776 = vand.u32 %v775, 4294901760
        %777 = vmatpush1.msra.mxu0 %v776
        %778 = vmatprep.subr.mxu0 0.0
        %779 = vmatpush2.msra.mxu0 0.0
        %780 = vmatprep.subr.mxu0 0.0
        %781 = vmatpush2.msra.mxu0 0.0
        %782 = vmatprep.subr.mxu0 0.0
        %783 = vmatpush2.msra.mxu0 0.0
        %784 = vmatprep.subr.mxu0 0.0
        %785 = vmatpush2.msra.mxu0 0.0
        %786 = vmatprep.subr.mxu0 0.0
        %787 = vmatpush2.msra.mxu0 0.0
        %788 = vmatprep.subr.mxu0 0.0
        %789 = vmatpush2.msra.mxu0 0.0
        %790 = vmatprep.subr.mxu0 0.0
        %791 = vmatpush2.msra.mxu0 0.0
        %792 = vmatprep.subr.mxu0 0.0
        %793 = vmatpush2.msra.mxu0 0.0
        %794 = vmatprep.subr.mxu0 0.0
        %795 = vmatpush2.msra.mxu0 0.0
        %796 = vmatprep.subr.mxu0 0.0
        %797 = vmatpush2.msra.mxu0 0.0
        %798 = vmatprep.subr.mxu0 0.0
        %799 = vmatpush2.msra.mxu0 0.0
        %800 = vmatprep.subr.mxu0 0.0
        %801 = vmatpush2.msra.mxu0 0.0
        %802 = vmatprep.subr.mxu0 0.0
        %803 = vmatpush2.msra.mxu0 0.0
        %804 = vmatprep.subr.mxu0 0.0
        %805 = vmatpush2.msra.mxu0 0.0
        %806 = vmatprep.subr.mxu0 0.0
        %807 = vmatpush2.msra.mxu0 0.0
        %808 = vmatprep.subr.mxu0 0.0
        %809 = vmatpush2.msra.mxu0 0.0
        %810 = vmatprep.mubr.f32.mxu0 0.0
        %v811 = vand.u32 %v191, 4294901760
        %812 = vmatmul.mubr.f32.gmra.mxu0 %v811
        %v813 = vpop.f32.mrf.mxu0
        %v814 = vadd.f32 %v738, %v813
        %v815 = vpop.f32.mrf.mxu0
        %816 = vdwg.mxu0
        %817 = vmatprep.subr.mxu0 0.0
        %818 = vmatpush1.msra.mxu0 0.0
        %819 = vmatprep.subr.mxu0 0.0
        %820 = vmatpush1.msra.mxu0 0.0
        %821 = vmatprep.subr.mxu0 0.0
        %822 = vmatpush1.msra.mxu0 0.0
        %823 = vmatprep.subr.mxu0 0.0
        %824 = vmatpush1.msra.mxu0 0.0
        %825 = vmatprep.subr.mxu0 0.0
        %826 = vmatpush1.msra.mxu0 0.0
        %827 = vmatprep.subr.mxu0 0.0
        %828 = vmatpush1.msra.mxu0 0.0
        %829 = vmatprep.subr.mxu0 0.0
        %830 = vmatpush1.msra.mxu0 0.0
        %831 = vmatprep.subr.mxu0 0.0
        %832 = vmatpush1.msra.mxu0 0.0
        %833 = vmatprep.subr.mxu0 0.0
        %834 = vmatpush1.msra.mxu0 0.0
        %835 = vmatprep.subr.mxu0 0.0
        %836 = vmatpush1.msra.mxu0 0.0
        %837 = vmatprep.subr.mxu0 0.0
        %838 = vmatpush1.msra.mxu0 0.0
        %839 = vmatprep.subr.mxu0 0.0
        %840 = vmatpush1.msra.mxu0 0.0
        %841 = vmatprep.subr.mxu0 0.0
        %842 = vmatpush1.msra.mxu0 0.0
        %843 = vmatprep.subr.mxu0 0.0
        %844 = vmatpush1.msra.mxu0 0.0
        %845 = vmatprep.subr.mxu0 0.0
        %846 = vmatpush1.msra.mxu0 0.0
        %847 = vmatprep.subr.mxu0 0.0
        %v848 = vand.u32 %v198, 4294901760
        %v849 = vsub.f32 %v198, %v848
        %850 = vmatpush1.msra.mxu0 %v849
        %851 = vmatprep.subr.mxu0 0.0
        %852 = vmatpush2.msra.mxu0 0.0
        %853 = vmatprep.subr.mxu0 0.0
        %854 = vmatpush2.msra.mxu0 0.0
        %855 = vmatprep.subr.mxu0 0.0
        %856 = vmatpush2.msra.mxu0 0.0
        %857 = vmatprep.subr.mxu0 0.0
        %858 = vmatpush2.msra.mxu0 0.0
        %859 = vmatprep.subr.mxu0 0.0
        %860 = vmatpush2.msra.mxu0 0.0
        %861 = vmatprep.subr.mxu0 0.0
        %862 = vmatpush2.msra.mxu0 0.0
        %863 = vmatprep.subr.mxu0 0.0
        %864 = vmatpush2.msra.mxu0 0.0
        %865 = vmatprep.subr.mxu0 0.0
        %866 = vmatpush2.msra.mxu0 0.0
        %867 = vmatprep.subr.mxu0 0.0
        %868 = vmatpush2.msra.mxu0 0.0
        %869 = vmatprep.subr.mxu0 0.0
        %870 = vmatpush2.msra.mxu0 0.0
        %871 = vmatprep.subr.mxu0 0.0
        %872 = vmatpush2.msra.mxu0 0.0
        %873 = vmatprep.subr.mxu0 0.0
        %874 = vmatpush2.msra.mxu0 0.0
        %875 = vmatprep.subr.mxu0 0.0
        %876 = vmatpush2.msra.mxu0 0.0
        %877 = vmatprep.subr.mxu0 0.0
        %878 = vmatpush2.msra.mxu0 0.0
        %879 = vmatprep.subr.mxu0 0.0
        %880 = vmatpush2.msra.mxu0 0.0
        %881 = vmatprep.subr.mxu0 0.0
        %882 = vmatpush2.msra.mxu0 0.0
        %883 = vmatprep.mubr.f32.mxu0 0.0
        %v884 = vand.u32 %v191, 4294901760
        %v885 = vsub.f32 %v191, %v884
        %886 = vmatmul.mubr.f32.gmra.mxu0 %v885
        %v887 = vpop.f32.mrf.mxu0
        %v888 = vadd.f32 %v814, %v887
        %v889 = vpop.f32.mrf.mxu0
        %890 = vdwg.mxu0
        %891 = vmatprep.subr.mxu0 0.0
        %892 = vmatpush1.msra.mxu0 0.0
        %893 = vmatprep.subr.mxu0 0.0
        %894 = vmatpush1.msra.mxu0 0.0
        %895 = vmatprep.subr.mxu0 0.0
        %896 = vmatpush1.msra.mxu0 0.0
        %897 = vmatprep.subr.mxu0 0.0
        %898 = vmatpush1.msra.mxu0 0.0
        %899 = vmatprep.subr.mxu0 0.0
        %900 = vmatpush1.msra.mxu0 0.0
        %901 = vmatprep.subr.mxu0 0.0
        %902 = vmatpush1.msra.mxu0 0.0
        %903 = vmatprep.subr.mxu0 0.0
        %904 = vmatpush1.msra.mxu0 0.0
        %905 = vmatprep.subr.mxu0 0.0
        %906 = vmatpush1.msra.mxu0 0.0
        %907 = vmatprep.subr.mxu0 0.0
        %908 = vmatpush1.msra.mxu0 0.0
        %909 = vmatprep.subr.mxu0 0.0
        %910 = vmatpush1.msra.mxu0 0.0
        %911 = vmatprep.subr.mxu0 0.0
        %912 = vmatpush1.msra.mxu0 0.0
        %913 = vmatprep.subr.mxu0 0.0
        %914 = vmatpush1.msra.mxu0 0.0
        %915 = vmatprep.subr.mxu0 0.0
        %916 = vmatpush1.msra.mxu0 0.0
        %917 = vmatprep.subr.mxu0 0.0
        %918 = vmatpush1.msra.mxu0 0.0
        %919 = vmatprep.subr.mxu0 0.0
        %920 = vmatpush1.msra.mxu0 0.0
        %921 = vmatprep.subr.mxu0 0.0
        %v922 = vand.u32 %v198, 4294901760
        %923 = vmatpush1.msra.mxu0 %v922
        %924 = vmatprep.subr.mxu0 0.0
        %925 = vmatpush2.msra.mxu0 0.0
        %926 = vmatprep.subr.mxu0 0.0
        %927 = vmatpush2.msra.mxu0 0.0
        %928 = vmatprep.subr.mxu0 0.0
        %929 = vmatpush2.msra.mxu0 0.0
        %930 = vmatprep.subr.mxu0 0.0
        %931 = vmatpush2.msra.mxu0 0.0
        %932 = vmatprep.subr.mxu0 0.0
        %933 = vmatpush2.msra.mxu0 0.0
        %934 = vmatprep.subr.mxu0 0.0
        %935 = vmatpush2.msra.mxu0 0.0
        %936 = vmatprep.subr.mxu0 0.0
        %937 = vmatpush2.msra.mxu0 0.0
        %938 = vmatprep.subr.mxu0 0.0
        %939 = vmatpush2.msra.mxu0 0.0
        %940 = vmatprep.subr.mxu0 0.0
        %941 = vmatpush2.msra.mxu0 0.0
        %942 = vmatprep.subr.mxu0 0.0
        %943 = vmatpush2.msra.mxu0 0.0
        %944 = vmatprep.subr.mxu0 0.0
        %945 = vmatpush2.msra.mxu0 0.0
        %946 = vmatprep.subr.mxu0 0.0
        %947 = vmatpush2.msra.mxu0 0.0
        %948 = vmatprep.subr.mxu0 0.0
        %949 = vmatpush2.msra.mxu0 0.0
        %950 = vmatprep.subr.mxu0 0.0
        %951 = vmatpush2.msra.mxu0 0.0
        %952 = vmatprep.subr.mxu0 0.0
        %953 = vmatpush2.msra.mxu0 0.0
        %954 = vmatprep.subr.mxu0 0.0
        %955 = vmatpush2.msra.mxu0 0.0
        %956 = vmatprep.mubr.f32.mxu0 0.0
        %v957 = vand.u32 %v191, 4294901760
        %v958 = vsub.f32 %v191, %v957
        %v959 = vand.u32 %v958, 4294901760
        %960 = vmatmul.mubr.f32.gmra.mxu0 %v959
        %v961 = vpop.f32.mrf.mxu0
        %v962 = vadd.f32 %v888, %v961
        %v963 = vpop.f32.mrf.mxu0
        %964 = vdwg.mxu0
        %965 = vmatprep.subr.mxu0 0.0
        %966 = vmatpush1.msra.mxu0 0.0
        %967 = vmatprep.subr.mxu0 0.0
        %968 = vmatpush1.msra.mxu0 0.0
        %969 = vmatprep.subr.mxu0 0.0
        %970 = vmatpush1.msra.mxu0 0.0
        %971 = vmatprep.subr.mxu0 0.0
        %972 = vmatpush1.msra.mxu0 0.0
        %973 = vmatprep.subr.mxu0 0.0
        %974 = vmatpush1.msra.mxu0 0.0
        %975 = vmatprep.subr.mxu0 0.0
        %976 = vmatpush1.msra.mxu0 0.0
        %977 = vmatprep.subr.mxu0 0.0
        %978 = vmatpush1.msra.mxu0 0.0
        %979 = vmatprep.subr.mxu0 0.0
        %980 = vmatpush1.msra.mxu0 0.0
        %981 = vmatprep.subr.mxu0 0.0
        %982 = vmatpush1.msra.mxu0 0.0
        %983 = vmatprep.subr.mxu0 0.0
        %984 = vmatpush1.msra.mxu0 0.0
        %985 = vmatprep.subr.mxu0 0.0
        %986 = vmatpush1.msra.mxu0 0.0
        %987 = vmatprep.subr.mxu0 0.0
        %988 = vmatpush1.msra.mxu0 0.0
        %989 = vmatprep.subr.mxu0 0.0
        %990 = vmatpush1.msra.mxu0 0.0
        %991 = vmatprep.subr.mxu0 0.0
        %992 = vmatpush1.msra.mxu0 0.0
        %993 = vmatprep.subr.mxu0 0.0
        %994 = vmatpush1.msra.mxu0 0.0
        %995 = vmatprep.subr.mxu0 0.0
        %v996 = vand.u32 %v198, 4294901760
        %v997 = vsub.f32 %v198, %v996
        %v998 = vand.u32 %v997, 4294901760
        %999 = vmatpush1.msra.mxu0 %v998
        %1000 = vmatprep.subr.mxu0 0.0
        %1001 = vmatpush2.msra.mxu0 0.0
        %1002 = vmatprep.subr.mxu0 0.0
        %1003 = vmatpush2.msra.mxu0 0.0
        %1004 = vmatprep.subr.mxu0 0.0
        %1005 = vmatpush2.msra.mxu0 0.0
        %1006 = vmatprep.subr.mxu0 0.0
        %1007 = vmatpush2.msra.mxu0 0.0
        %1008 = vmatprep.subr.mxu0 0.0
        %1009 = vmatpush2.msra.mxu0 0.0
        %1010 = vmatprep.subr.mxu0 0.0
        %1011 = vmatpush2.msra.mxu0 0.0
        %1012 = vmatprep.subr.mxu0 0.0
        %1013 = vmatpush2.msra.mxu0 0.0
        %1014 = vmatprep.subr.mxu0 0.0
        %1015 = vmatpush2.msra.mxu0 0.0
        %1016 = vmatprep.subr.mxu0 0.0
        %1017 = vmatpush2.msra.mxu0 0.0
        %1018 = vmatprep.subr.mxu0 0.0
        %1019 = vmatpush2.msra.mxu0 0.0
        %1020 = vmatprep.subr.mxu0 0.0
        %1021 = vmatpush2.msra.mxu0 0.0
        %1022 = vmatprep.subr.mxu0 0.0
        %1023 = vmatpush2.msra.mxu0 0.0
        %1024 = vmatprep.subr.mxu0 0.0
        %1025 = vmatpush2.msra.mxu0 0.0
        %1026 = vmatprep.subr.mxu0 0.0
        %1027 = vmatpush2.msra.mxu0 0.0
        %1028 = vmatprep.subr.mxu0 0.0
        %1029 = vmatpush2.msra.mxu0 0.0
        %1030 = vmatprep.subr.mxu0 0.0
        %1031 = vmatpush2.msra.mxu0 0.0
        %1032 = vmatprep.mubr.f32.mxu0 0.0
        %v1033 = vand.u32 %v191, 4294901760
        %1034 = vmatmul.mubr.f32.gmra.mxu0 %v1033
        %v1035 = vpop.f32.mrf.mxu0
        %v1036 = vadd.f32 %v962, %v1035
        %v1037 = vpop.f32.mrf.mxu0
        %1038 = vdwg.mxu0
        %1039 = vmatprep.subr.mxu0 0.0
        %1040 = vmatpush1.msra.mxu0 0.0
        %1041 = vmatprep.subr.mxu0 0.0
        %1042 = vmatpush1.msra.mxu0 0.0
        %1043 = vmatprep.subr.mxu0 0.0
        %1044 = vmatpush1.msra.mxu0 0.0
        %1045 = vmatprep.subr.mxu0 0.0
        %1046 = vmatpush1.msra.mxu0 0.0
        %1047 = vmatprep.subr.mxu0 0.0
        %1048 = vmatpush1.msra.mxu0 0.0
        %1049 = vmatprep.subr.mxu0 0.0
        %1050 = vmatpush1.msra.mxu0 0.0
        %1051 = vmatprep.subr.mxu0 0.0
        %1052 = vmatpush1.msra.mxu0 0.0
        %1053 = vmatprep.subr.mxu0 0.0
        %1054 = vmatpush1.msra.mxu0 0.0
        %1055 = vmatprep.subr.mxu0 0.0
        %1056 = vmatpush1.msra.mxu0 0.0
        %1057 = vmatprep.subr.mxu0 0.0
        %1058 = vmatpush1.msra.mxu0 0.0
        %1059 = vmatprep.subr.mxu0 0.0
        %1060 = vmatpush1.msra.mxu0 0.0
        %1061 = vmatprep.subr.mxu0 0.0
        %1062 = vmatpush1.msra.mxu0 0.0
        %1063 = vmatprep.subr.mxu0 0.0
        %1064 = vmatpush1.msra.mxu0 0.0
        %1065 = vmatprep.subr.mxu0 0.0
        %1066 = vmatpush1.msra.mxu0 0.0
        %1067 = vmatprep.subr.mxu0 0.0
        %1068 = vmatpush1.msra.mxu0 0.0
        %1069 = vmatprep.subr.mxu0 0.0
        %v1070 = vand.u32 %v198, 4294901760
        %1071 = vmatpush1.msra.mxu0 %v1070
        %1072 = vmatprep.subr.mxu0 0.0
        %1073 = vmatpush2.msra.mxu0 0.0
        %1074 = vmatprep.subr.mxu0 0.0
        %1075 = vmatpush2.msra.mxu0 0.0
        %1076 = vmatprep.subr.mxu0 0.0
        %1077 = vmatpush2.msra.mxu0 0.0
        %1078 = vmatprep.subr.mxu0 0.0
        %1079 = vmatpush2.msra.mxu0 0.0
        %1080 = vmatprep.subr.mxu0 0.0
        %1081 = vmatpush2.msra.mxu0 0.0
        %1082 = vmatprep.subr.mxu0 0.0
        %1083 = vmatpush2.msra.mxu0 0.0
        %1084 = vmatprep.subr.mxu0 0.0
        %1085 = vmatpush2.msra.mxu0 0.0
        %1086 = vmatprep.subr.mxu0 0.0
        %1087 = vmatpush2.msra.mxu0 0.0
        %1088 = vmatprep.subr.mxu0 0.0
        %1089 = vmatpush2.msra.mxu0 0.0
        %1090 = vmatprep.subr.mxu0 0.0
        %1091 = vmatpush2.msra.mxu0 0.0
        %1092 = vmatprep.subr.mxu0 0.0
        %1093 = vmatpush2.msra.mxu0 0.0
        %1094 = vmatprep.subr.mxu0 0.0
        %1095 = vmatpush2.msra.mxu0 0.0
        %1096 = vmatprep.subr.mxu0 0.0
        %1097 = vmatpush2.msra.mxu0 0.0
        %1098 = vmatprep.subr.mxu0 0.0
        %1099 = vmatpush2.msra.mxu0 0.0
        %1100 = vmatprep.subr.mxu0 0.0
        %1101 = vmatpush2.msra.mxu0 0.0
        %1102 = vmatprep.subr.mxu0 0.0
        %1103 = vmatpush2.msra.mxu0 0.0
        %1104 = vmatprep.mubr.f32.mxu0 0.0
        %v1105 = vand.u32 %v191, 4294901760
        %1106 = vmatmul.mubr.f32.gmra.mxu0 %v1105
        %v1107 = vpop.f32.mrf.mxu0
        %v1108 = vadd.f32 %v1036, %v1107
        %v1109 = vpop.f32.mrf.mxu0
        %1110 = vdwg.mxu0
        %v1111 = vand.u32 2147483647, %v661
        %vm1112 = vcmp.le.f32.partialorder %v1111, 0.7853982
        %vm1113 = vcmp.lt.s32.totalorder %v661, 0
        %v1114 = vand.u32 %v661, 2139095040
        %v1115 = vshrl.u32 %v1114, 23
        %v1116 = vsub.s32 %v1115, 127
        %v1117 = vand.u32 2147483647, %v661
        %v1118 = vand.u32 %v1117, 8388607
        %v1119 = vor.u32 %v1118, 8388608
        %v1120 = vsub.s32 0, %v1119
        %v1121 = vadd.s32 %v1116, 1
        %vm1122 = vcmp.gt.s32.totalorder %v1121, 0
        %v1123 = vsel %vm1122, %v1121, 0
        %v1124 = vshrl.u32 %v1123, 5
        %v1125 = vand.u32 %v1123, 31
        %v1126 = vsub.s32 32, %v1125
        %v1127 = vshrl.u32 683565275, %v1126
        %v1128 = vshll.u32 683565275, %v1125
        %v1129 = vshrl.u32 2475754826, %v1126
        %v1130 = vor.u32 %v1128, %v1129
        %v1131 = vshll.u32 2475754826, %v1125
        %v1132 = vshrl.u32 2131351028, %v1126
        %v1133 = vor.u32 %v1131, %v1132
        %v1134 = vshll.u32 2131351028, %v1125
        %v1135 = vshrl.u32 2102212464, %v1126
        %v1136 = vor.u32 %v1134, %v1135
        %v1137 = vshll.u32 2102212464, %v1125
        %v1138 = vshrl.u32 920167782, %v1126
        %v1139 = vor.u32 %v1137, %v1138
        %v1140 = vshll.u32 920167782, %v1125
        %v1141 = vshrl.u32 1326507024, %v1126
        %v1142 = vor.u32 %v1140, %v1141
        %vm1143 = vcmp.lt.s32.totalorder %v1124, 1
        %vm1144 = vcmp.lt.s32.totalorder %v1124, 2
        %vm1145 = vcmp.lt.s32.totalorder %v1124, 3
        %vm1146 = vcmp.lt.s32.totalorder %v1124, 4
        %v1147 = vsel %vm1143, %v1127, %v1130
        %v1148 = vsel %vm1146, %v1136, 2102212464
        %v1149 = vsel %vm1145, %v1133, %v1148
        %v1150 = vsel %vm1144, %v1147, %v1149
        %v1151 = vsel %vm1143, %v1130, %v1133
        %v1152 = vsel %vm1146, %v1139, 920167782
        %v1153 = vsel %vm1145, %v1136, %v1152
        %v1154 = vsel %vm1144, %v1151, %v1153
        %v1155 = vsel %vm1143, %v1133, %v1136
        %v1156 = vsel %vm1146, %v1142, 1326507024
        %v1157 = vsel %vm1145, %v1139, %v1156
        %v1158 = vsel %vm1144, %v1155, %v1157
        %v1159 = vshll.u32 %v1119, 8
        %v1160 = vmul.u32.u64.compose %v1159, %v1158
        %v1161 = vextract.low.u32 %v1160
        %v1162 = vextract.high.u32 %v1160
        %v1163 = vmul.u32.u64.compose %v1159, %v1154
        %v1164 = vextract.low.u32 %v1163
        %v1165 = vextract.high.u32 %v1163
        %v1166 = vmul.u32 %v1159, %v1150
        %v1167 = vadd.s32 %v1162, %v1164
        %vm1168 = vc.u32 %v1162, %v1164
        %v1169 = vadd.s32 %v1165, 1
        %v1170 = vsel %vm1168, %v1169, %v1165
        %v1171 = vadd.s32 %v1166, %v1170
        %v1172 = vadd.s32 %v1171, 536870912
        %v1173 = vshrl.u32 %v1172, 30
        %v1174 = vshll.u32 %v1173, 30
        %v1175 = vsub.s32 %v1171, %v1174
        %vm1176 = vcmp.lt.s32.totalorder %v1175, 0
        %v1177 = vsub.s32 0, %v1175
        %v1178 = vsel %vm1176, %v1177, %v1175
        %v1179 = vclz %v1178
        %v1180 = vsub.s32 %v1179, 2
        %vm1181 = vcmp.gt.s32.totalorder 0, %v1180
        %v1182 = vsel %vm1181, 0, %v1180
        %v1183 = vsub.s32 32, %v1182
        %v1184 = vshll.u32 %v1175, %v1182
        %v1185 = vshrl.u32 %v1167, %v1183
        %v1186 = vor.u32 %v1184, %v1185
        %v1187 = vsub.s32 4294967266, %v1182
        %v1188 = vadd.s32 %v1187, 127
        %v1189 = vshll.u32 %v1188, 23
        %v1190 = vor.u32 4788187, %v1189
        %v1191 = vand.u32 2147483647, %v1190
        %v1193 = vcvt.s32.f32 %v1186
        %v1194 = vmul.f32 %v1193, %v1191
        %v1195 = vxor.u32 %v1194, 2147483648
        %v1196 = vsel %vm1113, %v1195, %v1194
        %v1197 = vsub.s32 4, %v1173
        %v1198 = vsel %vm1113, %v1197, %v1173
        %v1199 = vsel %vm1112, %v661, %v1196
        %v1200 = vsel %vm1112, 0, %v1198
        %v1201 = vcosq.f32.pop %v1199
        %v1202 = vsinq.f32.pop %v1199
        %vm1203 = vweird.f32 %v661
        %v1204 = vadd.s32 %v1200, 3
        %v1205 = vand.u32 %v1204, 3
        %vm1206 = vcmp.lt.s32.totalorder %v1205, 2
        %vm1207 = vcmp.eq.s32.totalorder %v1205, 0
        %v1208 = vxor.u32 %v1202, 2147483648
        %v1209 = vsel %vm1207, %v1201, %v1208
        %vm1210 = vcmp.eq.s32.totalorder %v1205, 2
        %v1211 = vxor.u32 %v1201, 2147483648
        %v1212 = vsel %vm1210, %v1211, %v1202
        %v1213 = vsel %vm1206, %v1209, %v1212
        %v1214 = vsel %vm1203, nan, %v1213
        %v1215 = vand.u32 2147483647, %v663
        %vm1216 = vcmp.le.f32.partialorder %v1215, 0.7853982
        %vm1217 = vcmp.lt.s32.totalorder %v663, 0
        %v1218 = vand.u32 %v663, 2139095040
        %v1219 = vshrl.u32 %v1218, 23
        %v1220 = vsub.s32 %v1219, 127
        %v1221 = vand.u32 2147483647, %v663
        %v1222 = vand.u32 %v1221, 8388607
        %v1223 = vor.u32 %v1222, 8388608
        %v1224 = vsub.s32 0, %v1223
        %v1225 = vadd.s32 %v1220, 1
        %vm1226 = vcmp.gt.s32.totalorder %v1225, 0
        %v1227 = vsel %vm1226, %v1225, 0
        %v1228 = vshrl.u32 %v1227, 5
        %v1229 = vand.u32 %v1227, 31
        %v1230 = vsub.s32 32, %v1229
        %v1231 = vshrl.u32 683565275, %v1230
        %v1232 = vshll.u32 683565275, %v1229
        %v1233 = vshrl.u32 2475754826, %v1230
        %v1234 = vor.u32 %v1232, %v1233
        %v1235 = vshll.u32 2475754826, %v1229
        %v1236 = vshrl.u32 2131351028, %v1230
        %v1237 = vor.u32 %v1235, %v1236
        %v1238 = vshll.u32 2131351028, %v1229
        %v1239 = vshrl.u32 2102212464, %v1230
        %v1240 = vor.u32 %v1238, %v1239
        %v1241 = vshll.u32 2102212464, %v1229
        %v1242 = vshrl.u32 920167782, %v1230
        %v1243 = vor.u32 %v1241, %v1242
        %v1244 = vshll.u32 920167782, %v1229
        %v1245 = vshrl.u32 1326507024, %v1230
        %v1246 = vor.u32 %v1244, %v1245
        %vm1247 = vcmp.lt.s32.totalorder %v1228, 1
        %vm1248 = vcmp.lt.s32.totalorder %v1228, 2
        %vm1249 = vcmp.lt.s32.totalorder %v1228, 3
        %vm1250 = vcmp.lt.s32.totalorder %v1228, 4
        %v1251 = vsel %vm1247, %v1231, %v1234
        %v1252 = vsel %vm1250, %v1240, 2102212464
        %v1253 = vsel %vm1249, %v1237, %v1252
        %v1254 = vsel %vm1248, %v1251, %v1253
        %v1255 = vsel %vm1247, %v1234, %v1237
        %v1256 = vsel %vm1250, %v1243, 920167782
        %v1257 = vsel %vm1249, %v1240, %v1256
        %v1258 = vsel %vm1248, %v1255, %v1257
        %v1259 = vsel %vm1247, %v1237, %v1240
        %v1260 = vsel %vm1250, %v1246, 1326507024
        %v1261 = vsel %vm1249, %v1243, %v1260
        %v1262 = vsel %vm1248, %v1259, %v1261
        %v1263 = vshll.u32 %v1223, 8
        %v1264 = vmul.u32.u64.compose %v1263, %v1262
        %v1265 = vextract.low.u32 %v1264
        %v1266 = vextract.high.u32 %v1264
        %v1267 = vmul.u32.u64.compose %v1263, %v1258
        %v1268 = vextract.low.u32 %v1267
        %v1269 = vextract.high.u32 %v1267
        %v1270 = vmul.u32 %v1263, %v1254
        %v1271 = vadd.s32 %v1266, %v1268
        %vm1272 = vc.u32 %v1266, %v1268
        %v1273 = vadd.s32 %v1269, 1
        %v1274 = vsel %vm1272, %v1273, %v1269
        %v1275 = vadd.s32 %v1270, %v1274
        %v1276 = vadd.s32 %v1275, 536870912
        %v1277 = vshrl.u32 %v1276, 30
        %v1278 = vshll.u32 %v1277, 30
        %v1279 = vsub.s32 %v1275, %v1278
        %vm1280 = vcmp.lt.s32.totalorder %v1279, 0
        %v1281 = vsub.s32 0, %v1279
        %v1282 = vsel %vm1280, %v1281, %v1279
        %v1283 = vclz %v1282
        %v1284 = vsub.s32 %v1283, 2
        %vm1285 = vcmp.gt.s32.totalorder 0, %v1284
        %v1286 = vsel %vm1285, 0, %v1284
        %v1287 = vsub.s32 32, %v1286
        %v1288 = vshll.u32 %v1279, %v1286
        %v1289 = vshrl.u32 %v1271, %v1287
        %v1290 = vor.u32 %v1288, %v1289
        %v1291 = vsub.s32 4294967266, %v1286
        %v1292 = vadd.s32 %v1291, 127
        %v1293 = vshll.u32 %v1292, 23
        %v1294 = vor.u32 4788187, %v1293
        %v1295 = vand.u32 2147483647, %v1294
        %v1297 = vcvt.s32.f32 %v1290
        %v1298 = vmul.f32 %v1297, %v1295
        %v1299 = vxor.u32 %v1298, 2147483648
        %v1300 = vsel %vm1217, %v1299, %v1298
        %v1301 = vsub.s32 4, %v1277
        %v1302 = vsel %vm1217, %v1301, %v1277
        %v1303 = vsel %vm1216, %v663, %v1300
        %v1304 = vsel %vm1216, 0, %v1302
        %v1305 = vcosq.f32.pop %v1303
        %v1306 = vsinq.f32.pop %v1303
        %vm1307 = vweird.f32 %v663
        %v1308 = vadd.s32 %v1304, 3
        %v1309 = vand.u32 %v1308, 3
        %vm1310 = vcmp.lt.s32.totalorder %v1309, 2
        %vm1311 = vcmp.eq.s32.totalorder %v1309, 0
        %v1312 = vxor.u32 %v1306, 2147483648
        %v1313 = vsel %vm1311, %v1305, %v1312
        %vm1314 = vcmp.eq.s32.totalorder %v1309, 2
        %v1315 = vxor.u32 %v1305, 2147483648
        %v1316 = vsel %vm1314, %v1315, %v1306
        %v1317 = vsel %vm1310, %v1313, %v1316
        %v1318 = vsel %vm1307, nan, %v1317
        %v1319 = vand.u32 2147483647, %v1108
        %vm1320 = vcmp.le.f32.partialorder %v1319, 0.7853982
        %vm1321 = vcmp.lt.s32.totalorder %v1108, 0
        %v1322 = vand.u32 %v1108, 2139095040
        %v1323 = vshrl.u32 %v1322, 23
        %v1324 = vsub.s32 %v1323, 127
        %v1325 = vand.u32 2147483647, %v1108
        %v1326 = vand.u32 %v1325, 8388607
        %v1327 = vor.u32 %v1326, 8388608
        %v1328 = vsub.s32 0, %v1327
        %v1329 = vadd.s32 %v1324, 1
        %vm1330 = vcmp.gt.s32.totalorder %v1329, 0
        %v1331 = vsel %vm1330, %v1329, 0
        %v1332 = vshrl.u32 %v1331, 5
        %v1333 = vand.u32 %v1331, 31
        %v1334 = vsub.s32 32, %v1333
        %v1335 = vshrl.u32 683565275, %v1334
        %v1336 = vshll.u32 683565275, %v1333
        %v1337 = vshrl.u32 2475754826, %v1334
        %v1338 = vor.u32 %v1336, %v1337
        %v1339 = vshll.u32 2475754826, %v1333
        %v1340 = vshrl.u32 2131351028, %v1334
        %v1341 = vor.u32 %v1339, %v1340
        %v1342 = vshll.u32 2131351028, %v1333
        %v1343 = vshrl.u32 2102212464, %v1334
        %v1344 = vor.u32 %v1342, %v1343
        %v1345 = vshll.u32 2102212464, %v1333
        %v1346 = vshrl.u32 920167782, %v1334
        %v1347 = vor.u32 %v1345, %v1346
        %v1348 = vshll.u32 920167782, %v1333
        %v1349 = vshrl.u32 1326507024, %v1334
        %v1350 = vor.u32 %v1348, %v1349
        %vm1351 = vcmp.lt.s32.totalorder %v1332, 1
        %vm1352 = vcmp.lt.s32.totalorder %v1332, 2
        %vm1353 = vcmp.lt.s32.totalorder %v1332, 3
        %vm1354 = vcmp.lt.s32.totalorder %v1332, 4
        %v1355 = vsel %vm1351, %v1335, %v1338
        %v1356 = vsel %vm1354, %v1344, 2102212464
        %v1357 = vsel %vm1353, %v1341, %v1356
        %v1358 = vsel %vm1352, %v1355, %v1357
        %v1359 = vsel %vm1351, %v1338, %v1341
        %v1360 = vsel %vm1354, %v1347, 920167782
        %v1361 = vsel %vm1353, %v1344, %v1360
        %v1362 = vsel %vm1352, %v1359, %v1361
        %v1363 = vsel %vm1351, %v1341, %v1344
        %v1364 = vsel %vm1354, %v1350, 1326507024
        %v1365 = vsel %vm1353, %v1347, %v1364
        %v1366 = vsel %vm1352, %v1363, %v1365
        %v1367 = vshll.u32 %v1327, 8
        %v1368 = vmul.u32.u64.compose %v1367, %v1366
        %v1369 = vextract.low.u32 %v1368
        %v1370 = vextract.high.u32 %v1368
        %v1371 = vmul.u32.u64.compose %v1367, %v1362
        %v1372 = vextract.low.u32 %v1371
        %v1373 = vextract.high.u32 %v1371
        %v1374 = vmul.u32 %v1367, %v1358
        %v1375 = vadd.s32 %v1370, %v1372
        %vm1376 = vc.u32 %v1370, %v1372
        %v1377 = vadd.s32 %v1373, 1
        %v1378 = vsel %vm1376, %v1377, %v1373
        %v1379 = vadd.s32 %v1374, %v1378
        %v1380 = vadd.s32 %v1379, 536870912
        %v1381 = vshrl.u32 %v1380, 30
        %v1382 = vshll.u32 %v1381, 30
        %v1383 = vsub.s32 %v1379, %v1382
        %vm1384 = vcmp.lt.s32.totalorder %v1383, 0
        %v1385 = vsub.s32 0, %v1383
        %v1386 = vsel %vm1384, %v1385, %v1383
        %v1387 = vclz %v1386
        %v1388 = vsub.s32 %v1387, 2
        %vm1389 = vcmp.gt.s32.totalorder 0, %v1388
        %v1390 = vsel %vm1389, 0, %v1388
        %v1391 = vsub.s32 32, %v1390
        %v1392 = vshll.u32 %v1383, %v1390
        %v1393 = vshrl.u32 %v1375, %v1391
        %v1394 = vor.u32 %v1392, %v1393
        %v1395 = vsub.s32 4294967266, %v1390
        %v1396 = vadd.s32 %v1395, 127
        %v1397 = vshll.u32 %v1396, 23
        %v1398 = vor.u32 4788187, %v1397
        %v1399 = vand.u32 2147483647, %v1398
        %v1401 = vcvt.s32.f32 %v1394
        %v1402 = vmul.f32 %v1401, %v1399
        %v1403 = vxor.u32 %v1402, 2147483648
        %v1404 = vsel %vm1321, %v1403, %v1402
        %v1405 = vsub.s32 4, %v1381
        %v1406 = vsel %vm1321, %v1405, %v1381
        %v1407 = vsel %vm1320, %v1108, %v1404
        %v1408 = vsel %vm1320, 0, %v1406
        %v1409 = vcosq.f32.pop %v1407
        %v1410 = vsinq.f32.pop %v1407
        %vm1411 = vweird.f32 %v1108
        %v1412 = vadd.s32 %v1408, 3
        %v1413 = vand.u32 %v1412, 3
        %vm1414 = vcmp.lt.s32.totalorder %v1413, 2
        %vm1415 = vcmp.eq.s32.totalorder %v1413, 0
        %v1416 = vxor.u32 %v1410, 2147483648
        %v1417 = vsel %vm1415, %v1409, %v1416
        %vm1418 = vcmp.eq.s32.totalorder %v1413, 2
        %v1419 = vxor.u32 %v1409, 2147483648
        %v1420 = vsel %vm1418, %v1419, %v1410
        %v1421 = vsel %vm1414, %v1417, %v1420
        %v1422 = vsel %vm1411, nan, %v1421
        %1423 = vst [vmem:[%s161] sm:$0xff] %v1214
        %1424 = vst [vmem:[%s161 + $0x8] sm:$0xff] %v1318
        %1425 = vst.msk [vmem:[%s161 + $0x10] sm:$0xff] %vm189, %v1422
        %1426 = vst.msk [vmem:[%s161] sm:$0xff] %vm189, %v166
        %s1427 = sand.u32 %s93, 1
        %s1428 = scalar_lea.sflag [#allocation3], %s1427
        %s1429 = sand.u32 %s93, 1
        %s1430 = smul.addr %s1429, 24
        %s1431 = scalar_lea.vmem [#allocation2], %s1430
        // Predicated region
        $region33: #{tpu_custom_call.1} parent=31 // pred_check
          %p1432 = pneg %p103
        $region34: #{tpu_custom_call.1} parent=31 // pred_check_branch
          %1434 = sbr.rel (%p1432) target = $region36
        $region35: #{tpu_custom_call.1} parent=31 // pred_region
          %s1436 = ssub.s32 384, 384
          %1437 = vsyncadd %s1428, %s1436
          %s1438 = smul.addr %s17, 3
          %s1439 = smul.addr %s1438, 128
          %s1440 = scalar_lea.hbm %s3, %s1439
          %s1442 = sshll.u32 %s1431, 4
          %s1443 = int_to_ptr.vmem [resolvable:$true] %s1442
          %1445 = dma.vmem_to_hbm [thread:$0]  %s1443, 384, %s1440, %s1428
        $region36: #{tpu_custom_call.1} parent=31 // pred_fallthru
          _
      $region32: #{tpu_custom_call.1} parent=5 // pred_fallthru
        _
      %p1446 = scmp.le.s32.totalorder 2, %s12
      // Predicated region
      $region37: #{tpu_custom_call.1} parent=5 // pred_check
        %p1447 = pneg %p1446
      $region38: #{tpu_custom_call.1} parent=5 // pred_check_branch
        %1449 = sbr.rel (%p1447) target = $region40
      $region39: #{tpu_custom_call.1} parent=5 // pred_region
        %s1450 = ssub.s32 %s12, 2
        // Predicated region
        $region41: #{tpu_custom_call.1} parent=39 // pred_check
          %p1451 = pneg %p109
        $region42: #{tpu_custom_call.1} parent=39 // pred_check_branch
          %1453 = sbr.rel (%p1451) target = $region44
        $region43: #{tpu_custom_call.1} parent=39 // pred_region
          %s1454 = sand.u32 %s94, 1
          %s1455 = scalar_lea.sflag [#allocation3], %s1454
          %s1456 = sand.u32 %s94, 1
          %s1457 = smul.addr %s1456, 24
          %s1458 = scalar_lea.vmem [#allocation2], %s1457
          %1459 = dma.done %s1455, 384
        $region44: #{tpu_custom_call.1} parent=39 // pred_fallthru
          _
      $region40: #{tpu_custom_call.1} parent=5 // pred_fallthru
        _
    $region6: #{tpu_custom_call.1} parent=1 // loop_footer
      %s16 = sadd.s32 1, %s12
    $region7: #{tpu_custom_call.1} parent=1 // loop_footer_branch
      %11 = sbr.rel target = $region3
    $region8: #{tpu_custom_call.1} parent=1 // loop_exit
      _
    %1460 = vsyncpa [#allocation3], 1
    %s1461 = scalar_lea.sflag [#allocation3], 1
    %1462 = vsyncpa %s1461, 1

</llo_original>
